<compile_context>
chip_gen: v7x
topology: tpu7x:2x2x1
jax: 0.10.0
libtpu: 0.0.40
codegen_flags: <defaults>
</compile_context>

<pallas_src>
import functools

import jax
import jax.numpy as jnp
from jax.experimental import pallas as pl
from jax.experimental.pallas import tpu as pltpu

_LANE = 128
_MIB = 1024 * 1024


# --------------------------------------------------------------------------
# VMEM sizing helpers
# --------------------------------------------------------------------------
def _vmem_capacity_bytes():
    """Physical VMEM of the local chip (128 MiB v5e/v6e, 64 MiB/TC v7x)."""
    try:
        return int(pltpu.get_tpu_info().vmem_capacity_bytes)
    except Exception:
        return 64 * _MIB  # conservative (v7x-sized) fallback


def _padded2d_bytes(rows, cols, itemsize):
    """VMEM bytes of a (rows, cols) tile after (sublane, lane) padding."""
    sub = 8 * max(1, 4 // itemsize)  # 8 f32 / 16 bf16 / 32 int8 sublanes
    rp = pl.cdiv(rows, sub) * sub
    cp = pl.cdiv(cols, _LANE) * _LANE
    return rp * cp * itemsize


def _tile_bytes(bt, c, lanes, itemsize):
    return bt * _padded2d_bytes(c, lanes, itemsize)


# --------------------------------------------------------------------------
# Kernels
# --------------------------------------------------------------------------
def _se_fused_kernel(x_ref, w1_ref, w2_ref, o_ref, *, inv_hw):
    """Single pass: pool + FC + sigmoid + rescale on one (Bt, C, HW) slab."""
    # Global average pool over the (possibly non-lane-aligned) spatial axis.
    pooled = jnp.sum(x_ref[...], axis=-1, dtype=jnp.float32) * inv_hw   # (Bt, C)
    # Linear(C -> Cr, bias=False) + ReLU   (w1 in PyTorch (out, in) layout)
    h = jnp.einsum("bc,rc->br", pooled, w1_ref[...],
                   preferred_element_type=jnp.float32)                  # (Bt, Cr)
    h = jnp.maximum(h, 0.0)
    # Linear(Cr -> C, bias=False) + Sigmoid (w2 in PyTorch layout (C, Cr))
    y = jnp.einsum("br,cr->bc", h, w2_ref[...],
                   preferred_element_type=jnp.float32)                  # (Bt, C)
    y = jax.nn.sigmoid(y)
    # Re-read x for the rescale instead of keeping the multi-MiB slab value
    # live across the FC chain (VMEM re-loads are cheap: 3 vld/cycle).
    x = x_ref[...]
    o_ref[...] = (x * y[:, :, None].astype(x.dtype)).astype(o_ref.dtype)


def _se_pool_fc_kernel(x_ref, w1_ref, w2_ref, y_ref, acc_ref, *,
                       inv_hw, hw_tile, true_hw, ragged):
    """Pass 1 of the tiled path: accumulate spatial sums, finalize y once."""
    hw = pl.program_id(1)

    @pl.when(hw == 0)
    def _init():
        acc_ref[...] = jnp.zeros_like(acc_ref)

    x = x_ref[...]
    if ragged:
        # The last spatial block extends past HW; its padding lanes hold stale
        # VMEM (the input DMA is clipped to the array bounds), so mask them
        # out of the running sum.
        lane = jax.lax.broadcasted_iota(jnp.int32, x.shape, 2)
        x = jnp.where(hw * hw_tile + lane < true_hw, x, jnp.zeros_like(x))
    acc_ref[...] += jnp.sum(x, axis=-1, dtype=jnp.float32)              # (Bt, C)

    @pl.when(hw == pl.num_programs(1) - 1)
    def _finalize():
        pooled = acc_ref[...] * inv_hw                                  # (Bt, C)
        h = jnp.einsum("bc,rc->br", pooled, w1_ref[...],
                       preferred_element_type=jnp.float32)
        h = jnp.maximum(h, 0.0)
        y = jnp.einsum("br,cr->bc", h, w2_ref[...],
                       preferred_element_type=jnp.float32)
        y_ref[...] = jax.nn.sigmoid(y)[:, :, None].astype(y_ref.dtype)


def _se_scale_kernel(y_ref, x_ref, o_ref):
    """Pass 2 of the tiled path: out = x * y (channel-wise)."""
    x = x_ref[...]                                                      # (Bt, C, hw)
    o_ref[...] = (x * y_ref[...].astype(x.dtype)).astype(o_ref.dtype)


# --------------------------------------------------------------------------
# Wrapper
# --------------------------------------------------------------------------
def se_layer(x, w1, w2, *, buffer_budget_bytes=None, max_batch_tile=8):
    """SELayer forward.

    x  : (B, C, H, W)  NCHW, same as the PyTorch module
    w1 : (C//r, C)     first Linear weight  (PyTorch (out_features, in_features))
    w2 : (C, C//r)     second Linear weight
    returns (B, C, H, W)
    """
    B, C, H, W = x.shape
    Cr, C_in = w1.shape
    assert C_in == C and w2.shape == (C, Cr)

    HW = H * W
    itemsize = jnp.dtype(x.dtype).itemsize
    w_itemsize = jnp.dtype(w1.dtype).itemsize
    w_vmem = (_padded2d_bytes(Cr, C, w_itemsize) +
              _padded2d_bytes(C, Cr, w_itemsize))
    w_hbm = int((w1.size + w2.size) * w_itemsize)

    # --- VMEM budget / compiler limit derived from the actual chip -------
    vmem_cap = _vmem_capacity_bytes()
    vmem_ceiling = (vmem_cap * 3) // 4            # never ask Mosaic for more
    if buffer_budget_bytes is None:
        # ~80 MiB on 128-MiB parts (v5e/v6e), ~40 MiB on 64-MiB v7x.
        buffer_budget_bytes = (vmem_cap * 5) // 8
    budget = min(int(buffer_budget_bytes), vmem_ceiling - 4 * _MIB)

    x_flat = x.reshape(B, C, HW)                  # free: collapses trailing dims
    inv_hw = float(1.0 / HW)
    divisors = [d for d in range(min(B, max_batch_tile), 0, -1) if B % d == 0]

    # Footprints count double-buffered x in/out blocks plus double-buffered
    # weights (constant index maps) and pass-1 extras, with (sublane, lane)
    # padding of the physical VMEM tiles.
    def fused_fp(d):
        return 4 * _tile_bytes(d, C, HW, itemsize) + 2 * w_vmem

    def tiled_fp(d, lanes):
        return (4 * _tile_bytes(d, C, lanes, itemsize)   # x in + out
                + 2 * w_vmem                             # w1 + w2
                + 2 * _tile_bytes(d, C, 1, 4)            # y output block (f32)
                + _padded2d_bytes(d, C, 4))              # acc scratch (f32)

    # --- path selection: fused single pass (1 read + 1 write) ------------
    feasible = [d for d in divisors if fused_fp(d) <= budget]
    bt_fused = 0
    if feasible:
        # Prefer >= 4 grid steps (keeps the DMA pipeline busy and feeds both
        # v7x TensorCores), then >= 2, else whatever fits.
        for min_steps in (4, 2, 1):
            cands = [d for d in feasible if B // d >= min_steps]
            if cands:
                bt_fused = cands[0]   # largest tile meeting the step target
                break

    if bt_fused:
        bt = bt_fused
        footprint = fused_fp(bt)
        vmem_limit = min(vmem_ceiling, max(footprint + 4 * _MIB, 16 * _MIB))
        out_flat = pl.pallas_call(
            functools.partial(_se_fused_kernel, inv_hw=inv_hw),
            out_shape=jax.ShapeDtypeStruct((B, C, HW), x.dtype),
            grid_spec=pltpu.PrefetchScalarGridSpec(
                num_scalar_prefetch=0,
                grid=(B // bt,),
                in_specs=[
                    pl.BlockSpec((bt, C, HW), lambda i: (i, 0, 0)),
                    pl.BlockSpec((Cr, C), lambda i: (0, 0)),
                    pl.BlockSpec((C, Cr), lambda i: (0, 0)),
                ],
                out_specs=pl.BlockSpec((bt, C, HW), lambda i: (i, 0, 0)),
            ),
            compiler_params=pltpu.CompilerParams(
                dimension_semantics=("parallel",),
                vmem_limit_bytes=vmem_limit),
            cost_estimate=pl.CostEstimate(
                flops=int(2 * B * C * HW + 4 * B * C * Cr),
                transcendentals=int(B * C),
                bytes_accessed=int(2 * B * C * HW * itemsize + w_hbm)),
        )(x_flat, w1, w2)
        return out_flat.reshape(B, C, H, W)

    # --- two-pass spatially tiled path ------------------------------------
    # Batch tile: largest divisor of B whose tiles fit at >= 512 lanes,
    # falling back to a 128-lane minimum tile; fail loudly otherwise.
    bt = 0
    for lanes_floor in (4 * _LANE, _LANE):
        for d in divisors:
            if tiled_fp(d, lanes_floor) <= budget:
                bt = d
                break
        if bt:
            break
    if not bt:
        raise ValueError(
            f"SELayer Pallas kernel: even a minimal (1, {C}, 128) tile does "
            f"not fit the VMEM budget of {budget} bytes; increase "
            f"buffer_budget_bytes.")

    # Spatial tile: largest multiple of 128 lanes that fits the budget.  The
    # grid uses cdiv, so hw_tile need not divide HW; the ragged last block is
    # masked inside pass 1 and its OOB writes are dropped in pass 2.
    fixed = tiled_fp(bt, 0)
    per_group = 4 * _tile_bytes(bt, C, _LANE, itemsize)
    hw_groups_cap = pl.cdiv(HW, _LANE)
    groups = int(max(1, min((budget - fixed) // per_group, hw_groups_cap)))
    hw_tile = groups * _LANE
    n_hw = pl.cdiv(HW, hw_tile)
    ragged = (HW % hw_tile) != 0

    footprint = tiled_fp(bt, hw_tile)
    vmem_limit = min(vmem_ceiling, max(footprint + 4 * _MIB, 16 * _MIB))

    # Pass 1: pooled sums (f32 scratch) -> FC -> sigmoid -> y (B, C, 1).
    y = pl.pallas_call(
        functools.partial(_se_pool_fc_kernel, inv_hw=inv_hw, hw_tile=hw_tile,
                          true_hw=HW, ragged=ragged),
        out_shape=jax.ShapeDtypeStruct((B, C, 1), jnp.float32),
        grid_spec=pltpu.PrefetchScalarGridSpec(
            num_scalar_prefetch=0,
            grid=(B // bt, n_hw),
            in_specs=[
                pl.BlockSpec((bt, C, hw_tile), lambda i, j: (i, 0, j)),
                pl.BlockSpec((Cr, C), lambda i, j: (0, 0)),
                pl.BlockSpec((C, Cr), lambda i, j: (0, 0)),
            ],
            out_specs=pl.BlockSpec((bt, C, 1), lambda i, j: (i, 0, 0)),
            scratch_shapes=[pltpu.VMEM((bt, C), jnp.float32)],
        ),
        compiler_params=pltpu.CompilerParams(
            dimension_semantics=("parallel", "arbitrary"),
            vmem_limit_bytes=vmem_limit),
        cost_estimate=pl.CostEstimate(
            flops=int(B * C * HW + 4 * B * C * Cr),
            transcendentals=int(B * C),
            bytes_accessed=int(B * C * HW * itemsize + w_hbm + B * C * 4)),
    )(x_flat, w1, w2)

    # Pass 2: out = x * y, both grid axes parallel (megacore / 2nd TC).
    out_flat = pl.pallas_call(
        _se_scale_kernel,
        out_shape=jax.ShapeDtypeStruct((B, C, HW), x.dtype),
        grid_spec=pltpu.PrefetchScalarGridSpec(
            num_scalar_prefetch=0,
            grid=(B // bt, n_hw),
            in_specs=[
                pl.BlockSpec((bt, C, 1), lambda i, j: (i, 0, 0)),
                pl.BlockSpec((bt, C, hw_tile), lambda i, j: (i, 0, j)),
            ],
            out_specs=pl.BlockSpec((bt, C, hw_tile), lambda i, j: (i, 0, j)),
        ),
        compiler_params=pltpu.CompilerParams(
            dimension_semantics=("parallel", "parallel"),
            vmem_limit_bytes=vmem_limit),
        cost_estimate=pl.CostEstimate(
            flops=int(B * C * HW),
            transcendentals=0,
            bytes_accessed=int(2 * B * C * HW * itemsize + B * C * 4)),
    )(y, x_flat)
    return out_flat.reshape(B, C, H, W)


# --------------------------------------------------------------------------
# Pure-JAX reference (matches the PyTorch forward exactly)
# --------------------------------------------------------------------------
def se_layer_ref(x, w1, w2):
    pooled = jnp.mean(x, axis=(2, 3))                  # (B, C)
    h = jnp.maximum(pooled @ w1.T, 0.0)                # (B, C//r)
    y = jax.nn.sigmoid(h @ w2.T)                       # (B, C)
    return x * y[:, :, None, None]


if __name__ == "__main__":
    def run_case(key, B, C, H, W, reduction, **kw):
        Cr = max(C // reduction, 1)
        kx, k1, k2 = jax.random.split(key, 3)
        x = jax.random.normal(kx, (B, C, H, W), dtype=jnp.float32)
        w1 = jax.random.normal(k1, (Cr, C), dtype=jnp.float32) * (1.0 / jnp.sqrt(C))
        w2 = jax.random.normal(k2, (C, Cr), dtype=jnp.float32) * (1.0 / jnp.sqrt(Cr))
        out = jax.block_until_ready(se_layer(x, w1, w2, **kw))
        ref = se_layer_ref(x, w1, w2)
        assert out.shape == x.shape
        assert jnp.allclose(out, ref, atol=1e-5, rtol=1e-5), "mismatch vs reference"

    key = jax.random.PRNGKey(0)
    ka, kb, kc = jax.random.split(key, 3)

    # Fused single-pass path, lane-aligned HW (grid of 2 and 4 batch steps).
    run_case(ka, B=2, C=64, H=16, W=16, reduction=16)
    run_case(ka, B=4, C=64, H=16, W=16, reduction=16)
    # Fused path with non-128-aligned HW (49): full-dim block, no wrapper pad.
    run_case(kb, B=3, C=32, H=7, W=7, reduction=8)
    # Force the two-pass tiled path on an aligned shape (2 spatial tiles).
    run_case(ka, B=2, C=64, H=16, W=16, reduction=16,
             buffer_budget_bytes=300_000)
    # Force the two-pass tiled path on a ragged shape (HW=169 -> masked tail).
    run_case(kc, B=2, C=32, H=13, W=13, reduction=8,
             buffer_budget_bytes=160_000)

    print("KERNEL_OK")
</pallas_src>

<mosaic_0001>
module attributes {stable_mosaic.version = 11 : i64} {
  func.func @_se_fused_kernel(%arg0: i32, %arg1: memref<1x64x256xf32, #tpu.memory_space<vmem>>, %arg2: memref<4x64xf32, #tpu.memory_space<vmem>>, %arg3: memref<64x4xf32, #tpu.memory_space<vmem>>, %arg4: memref<1x64x256xf32, #tpu.memory_space<vmem>>) attributes {dimension_semantics = [#tpu.dimension_semantics<parallel>], iteration_bounds = array<i64: 2>, scalar_prefetch = 0 : i64, scratch_operands = 0 : i64, tpu.core_type = #tpu.core_type<tc>, window_params = [{transform_indices = @transform_0, window_bounds = array<i64: 1, 64, 256>}, {pipeline_mode = #tpu.pipeline_mode<synchronous>, transform_indices = @transform_1, window_bounds = array<i64: 4, 64>}, {pipeline_mode = #tpu.pipeline_mode<synchronous>, transform_indices = @transform_2, window_bounds = array<i64: 64, 4>}, {transform_indices = @transform_3, window_bounds = array<i64: 1, 64, 256>}]} {
    %c0 = arith.constant 0 : index
    %c0_0 = arith.constant 0 : index
    %c0_1 = arith.constant 0 : index
    %0 = vector.load %arg1[%c0, %c0_0, %c0_1] : memref<1x64x256xf32, #tpu.memory_space<vmem>>, vector<1x64x256xf32>
    %cst = arith.constant dense<0.000000e+00> : vector<1x64xf32>
    %1 = vector.multi_reduction <add>, %0, %cst [2] : vector<1x64x256xf32> to vector<1x64xf32>
    %cst_2 = arith.constant 3.906250e-03 : f32
    %2 = vector.broadcast %cst_2 : f32 to vector<1x64xf32>
    %3 = arith.mulf %1, %2 : vector<1x64xf32>
    %c0_3 = arith.constant 0 : index
    %c0_4 = arith.constant 0 : index
    %4 = vector.load %arg2[%c0_3, %c0_4] : memref<4x64xf32, #tpu.memory_space<vmem>>, vector<4x64xf32>
    "tpu.trace_start"() <{level = 10 : i32, message = "bc,rc->br"}> : () -> ()
    %cst_5 = arith.constant dense<0.000000e+00> : vector<1x4xf32>
    %5 = tpu.matmul %3, %4, %cst_5 {dimension_numbers = #tpu.dot_dimension_numbers<[1], [1], [0], [0], [0, 0, 1, 0], [], []>} : vector<1x64xf32>, vector<4x64xf32>, vector<1x4xf32> -> vector<1x4xf32>
    "tpu.trace_stop"() : () -> ()
    %cst_6 = arith.constant 0.000000e+00 : f32
    %6 = vector.broadcast %cst_6 : f32 to vector<1x4xf32>
    %7 = arith.maximumf %5, %6 : vector<1x4xf32>
    %c0_7 = arith.constant 0 : index
    %c0_8 = arith.constant 0 : index
    %8 = vector.load %arg3[%c0_7, %c0_8] : memref<64x4xf32, #tpu.memory_space<vmem>>, vector<64x4xf32>
    "tpu.trace_start"() <{level = 10 : i32, message = "br,cr->bc"}> : () -> ()
    %cst_9 = arith.constant dense<0.000000e+00> : vector<1x64xf32>
    %9 = tpu.matmul %7, %8, %cst_9 {dimension_numbers = #tpu.dot_dimension_numbers<[1], [1], [0], [0], [0, 0, 1, 0], [], []>} : vector<1x4xf32>, vector<64x4xf32>, vector<1x64xf32> -> vector<1x64xf32>
    "tpu.trace_stop"() : () -> ()
    %10 = arith.negf %9 : vector<1x64xf32>
    %11 = math.exp %10 : vector<1x64xf32>
    %cst_10 = arith.constant 1.000000e+00 : f32
    %12 = vector.broadcast %cst_10 : f32 to vector<1x64xf32>
    %13 = arith.addf %12, %11 : vector<1x64xf32>
    %14 = arith.divf %12, %13 : vector<1x64xf32>
    %c0_11 = arith.constant 0 : index
    %c0_12 = arith.constant 0 : index
    %c0_13 = arith.constant 0 : index
    %15 = vector.load %arg1[%c0_11, %c0_12, %c0_13] : memref<1x64x256xf32, #tpu.memory_space<vmem>>, vector<1x64x256xf32>
    %16 = vector.shape_cast %14 : vector<1x64xf32> to vector<1x64x1xf32>
    %17 = vector.broadcast %16 : vector<1x64x1xf32> to vector<1x64x256xf32>
    %18 = arith.mulf %15, %17 : vector<1x64x256xf32>
    %c0_14 = arith.constant 0 : index
    %c0_15 = arith.constant 0 : index
    %c0_16 = arith.constant 0 : index
    %19 = vector.load %arg4[%c0_14, %c0_15, %c0_16] : memref<1x64x256xf32, #tpu.memory_space<vmem>>, vector<1x64x256xf32>
    tpu.vector_store %arg4[%c0_14, %c0_15, %c0_16], %18 {strides = array<i32>} : memref<1x64x256xf32, #tpu.memory_space<vmem>>, vector<1x64x256xf32>,
    return
  }
  func.func @transform_0(%arg0: i32) -> (i32, i32, i32) {
    %c0_i32 = arith.constant 0 : i32
    %c0_i32_0 = arith.constant 0 : i32
    %c0_i32_1 = arith.constant 0 : i32
    return %arg0, %c0_i32, %c0_i32_0 : i32, i32, i32
  }
  func.func @transform_1(%arg0: i32) -> (i32, i32) {
    %c0_i32 = arith.constant 0 : i32
    %c0_i32_0 = arith.constant 0 : i32
    %c0_i32_1 = arith.constant 0 : i32
    return %c0_i32, %c0_i32_0 : i32, i32
  }
  func.func @transform_2(%arg0: i32) -> (i32, i32) {
    %c0_i32 = arith.constant 0 : i32
    %c0_i32_0 = arith.constant 0 : i32
    %c0_i32_1 = arith.constant 0 : i32
    return %c0_i32, %c0_i32_0 : i32, i32
  }
  func.func @transform_3(%arg0: i32) -> (i32, i32, i32) {
    %c0_i32 = arith.constant 0 : i32
    %c0_i32_0 = arith.constant 0 : i32
    %c0_i32_1 = arith.constant 0 : i32
    return %arg0, %c0_i32, %c0_i32_0 : i32, i32, i32
  }
}

</mosaic_0001>

<llo_original>
// kernel: tpu_custom_call.1
$region0: #{tpu_custom_call.1}
  #allocation0 [shape = 'u32[]', space=smem, size = 0x4, offset = 0x4, fixed_abs, tag = 'smem constant byte address 0x4 - core index']
  #allocation1 [shape = 'u32[144,128]{1,0:T(1,128)}', space=vmem, size = 0x12000, scoped, tag = 'internal scratch']
  %s0 = inlined_call_operand.hbm [shape: f32[2,64,256], index: 0, kind: input, shape index: {}]
  %s1 = inlined_call_operand.vmem [shape: f32[4,64], index: 1, kind: input, shape index: {}]
  %s2 = inlined_call_operand.vmem [shape: f32[64,4], index: 2, kind: input, shape index: {}]
  %s3 = inlined_call_operand.hbm [shape: f32[2,64,256], index: 3, kind: output, shape index: {}]
  %s4 = sld [smem:[#allocation0]]
  $region49: #{tpu_custom_call.1} parent=0
    _
  %s6 = ssub.s32 1, %s4
  %s7 = scalar_select 0, %s6, %s4
  $region1: #{tpu_custom_call.1} parent=0
    #allocation2 [shape = 'u8[131072]{0}', space=vmem, size = 0x20000, scoped, tag = 'input window, operand 0']
    #allocation3 [shape = 's32[2]{0}', space=sflag, size = 0x8, scoped, tag = 'scoped memory for tpu_custom_call.1']
    #allocation4 [shape = 's32[2]{0}', space=sflag, size = 0x8, scoped, tag = 'scoped memory for tpu_custom_call.1']
    #allocation5 [shape = 'u8[131072]{0}', space=vmem, size = 0x20000, scoped, tag = 'output window, operand 0']
    %8 = vsyncpa [#allocation3], 0
    %s9 = scalar_lea.sflag [#allocation3], 1
    %10 = vsyncpa %s9, 0
    %11 = vsyncpa [#allocation4], 0
    %s12 = scalar_lea.sflag [#allocation4], 1
    %13 = vsyncpa %s12, 0
    loop: start=0, step=1, limit=4
    $region2: #{tpu_custom_call.1} parent=1 // loop_pre_header
      _
    $region3: #{tpu_custom_call.1} parent=1 // loop_header
      %s15 = sphi 0, %s19
      %p16 = scmp.ge.s32.totalorder %s15, 4
      %s25 = sphi 0, %s27
      %s28 = sphi 0, %s25
      %s29 = sphi 0, %s28
      %s45 = sphi 0, %s29
      %s49 = sphi 0, %s49
      %s51 = sphi 0, %s49
      %s52 = sphi 0, %s51
      %s66 = sphi 0, %s52
      %s70 = sphi 0, %s70
      %s72 = sphi 0, %s70
      %s73 = sphi 0, %s72
      %s87 = sphi 0, %s73
      %s93 = sphi 0, %s95
      %s96 = sphi 0, %s93
      %s97 = sphi 0, %s96
      %s113 = sphi 0, %s97
    $region4: #{tpu_custom_call.1} parent=1 // loop_header_branch
      %18 = sbr.rel (%p16) target = $region8
    $region5: #{tpu_custom_call.1} parent=1 // loop_body
      %s20 = ssub.s32 %s15, 1
      %s21 = ssub.s32 %s15, 2
      %s22 = sadd.s32 %s15, 1
      %s23 = ssub.s32 %s15, %s22
      %p24 = scmp.eq.s32.totalorder %s23, 0
      %s26 = sadd.s32 %s25, 1
      %s27 = scalar_select %p24, %s25, %s26
      %p30 = pneg %p24
      %p31 = scmp.eq.s32.totalorder %s15, 1
      %p32 = por %p30, %p31
      %p33 = scmp.ne.s32.totalorder %s25, %s28
      %p34 = scmp.eq.s32.totalorder %s15, 0
      %p35 = por %p33, %p34
      %p36 = scmp.ne.s32.totalorder %s25, %s28
      %p37 = scmp.eq.s32.totalorder %s20, 1
      %p38 = por %p36, %p37
      %p39 = scmp.ne.s32.totalorder %s28, %s29
      %p40 = scmp.eq.s32.totalorder %s20, 0
      %p41 = por %p39, %p40
      %p42 = scmp.ne.s32.totalorder %s28, %s29
      %p43 = scmp.eq.s32.totalorder %s21, 1
      %p44 = por %p42, %p43
      %p46 = scmp.ne.s32.totalorder %s29, %s45
      %p47 = scmp.eq.s32.totalorder %s21, 0
      %p48 = por %p46, %p47
      %s50 = sadd.s32 %s49, 1
      %p53 = scmp.eq.s32.totalorder %s15, 1
      %p54 = scmp.ne.s32.totalorder %s49, %s51
      %p55 = scmp.eq.s32.totalorder %s15, 0
      %p56 = por %p54, %p55
      %p57 = scmp.ne.s32.totalorder %s49, %s51
      %p58 = scmp.eq.s32.totalorder %s20, 1
      %p59 = por %p57, %p58
      %p60 = scmp.ne.s32.totalorder %s51, %s52
      %p61 = scmp.eq.s32.totalorder %s20, 0
      %p62 = por %p60, %p61
      %p63 = scmp.ne.s32.totalorder %s51, %s52
      %p64 = scmp.eq.s32.totalorder %s21, 1
      %p65 = por %p63, %p64
      %p67 = scmp.ne.s32.totalorder %s52, %s66
      %p68 = scmp.eq.s32.totalorder %s21, 0
      %p69 = por %p67, %p68
      %s71 = sadd.s32 %s70, 1
      %p74 = scmp.eq.s32.totalorder %s15, 1
      %p75 = scmp.ne.s32.totalorder %s70, %s72
      %p76 = scmp.eq.s32.totalorder %s15, 0
      %p77 = por %p75, %p76
      %p78 = scmp.ne.s32.totalorder %s70, %s72
      %p79 = scmp.eq.s32.totalorder %s20, 1
      %p80 = por %p78, %p79
      %p81 = scmp.ne.s32.totalorder %s72, %s73
      %p82 = scmp.eq.s32.totalorder %s20, 0
      %p83 = por %p81, %p82
      %p84 = scmp.ne.s32.totalorder %s72, %s73
      %p85 = scmp.eq.s32.totalorder %s21, 1
      %p86 = por %p84, %p85
      %p88 = scmp.ne.s32.totalorder %s73, %s87
      %p89 = scmp.eq.s32.totalorder %s21, 0
      %p90 = por %p88, %p89
      %s91 = ssub.s32 %s15, %s22
      %p92 = scmp.eq.s32.totalorder %s91, 0
      %s94 = sadd.s32 %s93, 1
      %s95 = scalar_select %p92, %s93, %s94
      %p98 = pneg %p92
      %p99 = scmp.eq.s32.totalorder %s15, 1
      %p100 = por %p98, %p99
      %p101 = scmp.ne.s32.totalorder %s93, %s96
      %p102 = scmp.eq.s32.totalorder %s15, 0
      %p103 = por %p101, %p102
      %p104 = scmp.ne.s32.totalorder %s93, %s96
      %p105 = scmp.eq.s32.totalorder %s20, 1
      %p106 = por %p104, %p105
      %p107 = scmp.ne.s32.totalorder %s96, %s97
      %p108 = scmp.eq.s32.totalorder %s20, 0
      %p109 = por %p107, %p108
      %p110 = scmp.ne.s32.totalorder %s96, %s97
      %p111 = scmp.eq.s32.totalorder %s21, 1
      %p112 = por %p110, %p111
      %p114 = scmp.ne.s32.totalorder %s97, %s113
      %p115 = scmp.eq.s32.totalorder %s21, 0
      %p116 = por %p114, %p115
      %p117 = scmp.le.s32.totalorder 1, %s15
      %p118 = scmp.lt.s32.totalorder %s15, 3
      %p119 = pnand %p117, %p118
      %p120 = pneg %p119
      // Predicated region
      $region9: #{tpu_custom_call.1} parent=5 // pred_check
        _
      $region10: #{tpu_custom_call.1} parent=5 // pred_check_branch
        %122 = sbr.rel (%p119) target = $region12
      $region11: #{tpu_custom_call.1} parent=5 // pred_region
        %s123 = ssub.s32 %s15, 1
        // Predicated region
        $region13: #{tpu_custom_call.1} parent=11 // pred_check
          %p124 = pneg %p62
        $region14: #{tpu_custom_call.1} parent=11 // pred_check_branch
          %126 = sbr.rel (%p124) target = $region16
        $region15: #{tpu_custom_call.1} parent=11 // pred_region
          _
        $region16: #{tpu_custom_call.1} parent=11 // pred_fallthru
          _
        // Predicated region
        $region17: #{tpu_custom_call.1} parent=11 // pred_check
          %p127 = pneg %p83
        $region18: #{tpu_custom_call.1} parent=11 // pred_check_branch
          %129 = sbr.rel (%p127) target = $region20
        $region19: #{tpu_custom_call.1} parent=11 // pred_region
          _
        $region20: #{tpu_custom_call.1} parent=11 // pred_fallthru
          _
      $region12: #{tpu_custom_call.1} parent=5 // pred_fallthru
        _
      %p130 = scmp.lt.s32.totalorder %s15, 2
      // Predicated region
      $region21: #{tpu_custom_call.1} parent=5 // pred_check
        %p131 = pneg %p130
      $region22: #{tpu_custom_call.1} parent=5 // pred_check_branch
        %133 = sbr.rel (%p131) target = $region24
      $region23: #{tpu_custom_call.1} parent=5 // pred_region
        // Predicated region
        $region25: #{tpu_custom_call.1} parent=23 // pred_check
          %p134 = pneg %p35
        $region26: #{tpu_custom_call.1} parent=23 // pred_check_branch
          %136 = sbr.rel (%p134) target = $region28
        $region27: #{tpu_custom_call.1} parent=23 // pred_region
          %s137 = sand.u32 %s25, 1
          %s138 = scalar_lea.sflag [#allocation3], %s137
          %s139 = sand.u32 %s25, 1
          %s140 = smul.addr %s139, 128
          %s141 = scalar_lea.vmem [#allocation2], %s140
          %s143 = ssub.s32 2048, 2048
          %144 = vsyncadd %s138, %s143
          %s145 = smul.addr %s15, 16
          %s146 = smul.addr %s145, 128
          %s147 = scalar_lea.hbm %s0, %s146
          %s148 = sshll.u32 %s141, 4
          %s149 = int_to_ptr.vmem [resolvable:$true] %s148
          %154 = dma.hbm_to_vmem [thread:$0]  %s147, 2048, %s149, %s138, 256, 256, 16
        $region28: #{tpu_custom_call.1} parent=23 // pred_fallthru
          _
      $region24: #{tpu_custom_call.1} parent=5 // pred_fallthru
        _
      %p155 = scmp.le.s32.totalorder 1, %s15
      %p156 = scmp.lt.s32.totalorder %s15, 3
      %p157 = pnand %p155, %p156
      %p158 = pneg %p157
      // Predicated region
      $region29: #{tpu_custom_call.1} parent=5 // pred_check
        _
      $region30: #{tpu_custom_call.1} parent=5 // pred_check_branch
        %160 = sbr.rel (%p157) target = $region32
      $region31: #{tpu_custom_call.1} parent=5 // pred_region
        %s161 = ssub.s32 %s15, 1
        %s162 = sand.u32 %s28, 1
        %s163 = scalar_lea.sflag [#allocation3], %s162
        %s164 = sand.u32 %s28, 1
        %s165 = smul.addr %s164, 128
        %s166 = scalar_lea.vmem [#allocation2], %s165
        // Predicated region
        $region33: #{tpu_custom_call.1} parent=31 // pred_check
          %p167 = pneg %p41
        $region34: #{tpu_custom_call.1} parent=31 // pred_check_branch
          %169 = sbr.rel (%p167) target = $region36
        $region35: #{tpu_custom_call.1} parent=31 // pred_region
          %170 = dma.done %s163, 2048
        $region36: #{tpu_custom_call.1} parent=31 // pred_fallthru
          _
        %s171 = sand.u32 %s28, 1
        %s172 = scalar_lea.sflag [#allocation3], %s171
        %s173 = sand.u32 %s28, 1
        %s174 = smul.addr %s173, 128
        %s175 = scalar_lea.vmem [#allocation2], %s174
        %p176 = pneg %p41
        %p177 = pneg %p38
        %p178 = pneg %p62
        %p179 = pneg %p59
        %p180 = pneg %p83
        %p181 = pneg %p80
        %p182 = pneg %p109
        %p183 = pneg %p106
        %s184 = sand.u32 %s96, 1
        %s185 = scalar_lea.sflag [#allocation4], %s184
        %s186 = sand.u32 %s96, 1
        %s187 = smul.addr %s186, 128
        %s188 = scalar_lea.vmem [#allocation5], %s187
        %v189 = vld [vmem:[%s166] sm:$0xff]
        %v190 = vld [vmem:[%s166 + $0x8] sm:$0xff]
        %v191 = vld [vmem:[%s166 + $0x10] sm:$0xff]
        %v192 = vld [vmem:[%s166 + $0x18] sm:$0xff]
        %v193 = vld [vmem:[%s166 + $0x20] sm:$0xff]
        %v194 = vld [vmem:[%s166 + $0x28] sm:$0xff]
        %v195 = vld [vmem:[%s166 + $0x30] sm:$0xff]
        %v196 = vld [vmem:[%s166 + $0x38] sm:$0xff]
        %v197 = vld [vmem:[%s166 + $0x40] sm:$0xff]
        %v198 = vld [vmem:[%s166 + $0x48] sm:$0xff]
        %v199 = vld [vmem:[%s166 + $0x50] sm:$0xff]
        %v200 = vld [vmem:[%s166 + $0x58] sm:$0xff]
        %v201 = vld [vmem:[%s166 + $0x60] sm:$0xff]
        %v202 = vld [vmem:[%s166 + $0x68] sm:$0xff]
        %v203 = vld [vmem:[%s166 + $0x70] sm:$0xff]
        %v204 = vld [vmem:[%s166 + $0x78] sm:$0xff]
        %v205 = vadd.f32 %v189, %v190
        %206 = vadd.xlane.f32.xlu0 %v205
        %v207 = vpop.xlane.xlu0 %206
        %v208 = vadd.f32 %v191, %v192
        %209 = vadd.xlane.f32.xlu0 %v208
        %v210 = vpop.xlane.xlu0 %209
        %v211 = vadd.f32 %v193, %v194
        %212 = vadd.xlane.f32.xlu0 %v211
        %v213 = vpop.xlane.xlu0 %212
        %v214 = vadd.f32 %v195, %v196
        %215 = vadd.xlane.f32.xlu0 %v214
        %v216 = vpop.xlane.xlu0 %215
        %v217 = vadd.f32 %v197, %v198
        %218 = vadd.xlane.f32.xlu0 %v217
        %v219 = vpop.xlane.xlu0 %218
        %v220 = vadd.f32 %v199, %v200
        %221 = vadd.xlane.f32.xlu0 %v220
        %v222 = vpop.xlane.xlu0 %221
        %v223 = vadd.f32 %v201, %v202
        %224 = vadd.xlane.f32.xlu0 %v223
        %v225 = vpop.xlane.xlu0 %224
        %v226 = vadd.f32 %v203, %v204
        %227 = vadd.xlane.f32.xlu0 %v226
        %v228 = vpop.xlane.xlu0 %227
        %v229 = vmul.f32 %v207, 0.00390625
        %v230 = vmul.f32 %v210, 0.00390625
        %v231 = vmul.f32 %v213, 0.00390625
        %v232 = vmul.f32 %v216, 0.00390625
        %v233 = vmul.f32 %v219, 0.00390625
        %v234 = vmul.f32 %v222, 0.00390625
        %v235 = vmul.f32 %v225, 0.00390625
        %v236 = vmul.f32 %v228, 0.00390625
        %v237 = vld [vmem:[%s1] sm:$0xf]
        %v246 = vlaneseq
        %v247 = vand.u32 %v246, 127
        %v248 = vlaneseq
        %v249 = vshrl.u32 %v248, 7
        %v250 = vsub.s32 %v247, %v249
        %v251 = vrot.slane %v229, %v250
        %v252 = vadd.s32 %v247, 4294967288
        %v253 = vlaneseq
        %v254 = vshrl.u32 %v253, 7
        %v255 = vsub.s32 %v252, %v254
        %v256 = vrot.slane %v230, %v255
        %vm257 = vcmask 130112
        %v258 = vsel %vm257, %v256, %v251
        %v259 = vadd.s32 %v247, 4294967280
        %v260 = vlaneseq
        %v261 = vshrl.u32 %v260, 7
        %v262 = vsub.s32 %v259, %v261
        %v263 = vrot.slane %v231, %v262
        %vm264 = vcmask 195712
        %v265 = vsel %vm264, %v263, %v258
        %v266 = vadd.s32 %v247, 4294967272
        %v267 = vlaneseq
        %v268 = vshrl.u32 %v267, 7
        %v269 = vsub.s32 %v266, %v268
        %v270 = vrot.slane %v232, %v269
        %vm271 = vcmask 261312
        %v272 = vsel %vm271, %v270, %v265
        %v273 = vadd.s32 %v247, 4294967264
        %v274 = vlaneseq
        %v275 = vshrl.u32 %v274, 7
        %v276 = vsub.s32 %v273, %v275
        %v277 = vrot.slane %v233, %v276
        %vm278 = vcmask 326912
        %v279 = vsel %vm278, %v277, %v272
        %v280 = vadd.s32 %v247, 4294967256
        %v281 = vlaneseq
        %v282 = vshrl.u32 %v281, 7
        %v283 = vsub.s32 %v280, %v282
        %v284 = vrot.slane %v234, %v283
        %vm285 = vcmask 392512
        %v286 = vsel %vm285, %v284, %v279
        %v287 = vadd.s32 %v247, 4294967248
        %v288 = vlaneseq
        %v289 = vshrl.u32 %v288, 7
        %v290 = vsub.s32 %v287, %v289
        %v291 = vrot.slane %v235, %v290
        %vm292 = vcmask 458112
        %v293 = vsel %vm292, %v291, %v286
        %v294 = vadd.s32 %v247, 4294967240
        %v295 = vlaneseq
        %v296 = vshrl.u32 %v295, 7
        %v297 = vsub.s32 %v294, %v296
        %v298 = vrot.slane %v236, %v297
        %vm299 = vcmask 523712
        %v300 = vsel %vm299, %v298, %v293
        %vm301 = vcmask 523264
        %v302 = vsel %vm301, %v300, 0
        %v305 = vsel %vm301, %v237, 0
        %307 = vmatprep.subr.mxu0 0.0
        %308 = vmatpush1.xpose.msra.mxu0 %v305
        %309 = vmatprep.subr.mxu0 0.0
        %310 = vmatpush1.xpose.msra.mxu0 0.0
        %311 = vmatprep.subr.mxu0 0.0
        %312 = vmatpush1.xpose.msra.mxu0 0.0
        %313 = vmatprep.subr.mxu0 0.0
        %314 = vmatpush1.xpose.msra.mxu0 0.0
        %315 = vmatprep.subr.mxu0 0.0
        %316 = vmatpush1.xpose.msra.mxu0 0.0
        %317 = vmatprep.subr.mxu0 0.0
        %318 = vmatpush1.xpose.msra.mxu0 0.0
        %319 = vmatprep.subr.mxu0 0.0
        %320 = vmatpush1.xpose.msra.mxu0 0.0
        %321 = vmatprep.subr.mxu0 0.0
        %322 = vmatpush1.xpose.msra.mxu0 0.0
        %323 = vmatprep.subr.mxu0 0.0
        %324 = vmatpush1.xpose.msra.mxu0 0.0
        %325 = vmatprep.subr.mxu0 0.0
        %326 = vmatpush1.xpose.msra.mxu0 0.0
        %327 = vmatprep.subr.mxu0 0.0
        %328 = vmatpush1.xpose.msra.mxu0 0.0
        %329 = vmatprep.subr.mxu0 0.0
        %330 = vmatpush1.xpose.msra.mxu0 0.0
        %331 = vmatprep.subr.mxu0 0.0
        %332 = vmatpush1.xpose.msra.mxu0 0.0
        %333 = vmatprep.subr.mxu0 0.0
        %334 = vmatpush1.xpose.msra.mxu0 0.0
        %335 = vmatprep.subr.mxu0 0.0
        %336 = vmatpush1.xpose.msra.mxu0 0.0
        %337 = vmatprep.subr.mxu0 0.0
        %338 = vmatpush1.xpose.msra.mxu0 0.0
        %339 = vmatprep.subr.mxu0 0.0
        %340 = vmatpush1.xpose.msra.mxu0 0.0
        %341 = vmatprep.subr.mxu0 0.0
        %342 = vmatpush1.xpose.msra.mxu0 0.0
        %343 = vmatprep.subr.mxu0 0.0
        %344 = vmatpush1.xpose.msra.mxu0 0.0
        %345 = vmatprep.subr.mxu0 0.0
        %346 = vmatpush1.xpose.msra.mxu0 0.0
        %347 = vmatprep.subr.mxu0 0.0
        %348 = vmatpush1.xpose.msra.mxu0 0.0
        %349 = vmatprep.subr.mxu0 0.0
        %350 = vmatpush1.xpose.msra.mxu0 0.0
        %351 = vmatprep.subr.mxu0 0.0
        %352 = vmatpush1.xpose.msra.mxu0 0.0
        %353 = vmatprep.subr.mxu0 0.0
        %354 = vmatpush1.xpose.msra.mxu0 0.0
        %355 = vmatprep.subr.mxu0 0.0
        %356 = vmatpush1.xpose.msra.mxu0 0.0
        %357 = vmatprep.subr.mxu0 0.0
        %358 = vmatpush1.xpose.msra.mxu0 0.0
        %359 = vmatprep.subr.mxu0 0.0
        %360 = vmatpush1.xpose.msra.mxu0 0.0
        %361 = vmatprep.subr.mxu0 0.0
        %362 = vmatpush1.xpose.msra.mxu0 0.0
        %363 = vmatprep.subr.mxu0 0.0
        %364 = vmatpush1.xpose.msra.mxu0 0.0
        %365 = vmatprep.subr.mxu0 0.0
        %366 = vmatpush1.xpose.msra.mxu0 0.0
        %367 = vmatprep.subr.mxu0 0.0
        %368 = vmatpush1.xpose.msra.mxu0 0.0
        %369 = vmatprep.subr.mxu0 0.0
        %370 = vmatpush1.xpose.msra.mxu0 0.0
        %371 = vmatprep.mubr.f32.mxu0 0.0
        %372 = vmatmul.mubr.f32.gmra.mrb[0].mxu0 %v302
        %v373 = vpop.f32.mrb[0].mxu0
        %v374 = vadd.f32 0.0, %v373
        %v375 = vpop.f32.mrb[0].mxu0
        %376 = vdwg.mxu0
        %v377 = vmax.f32 %v374, 0.0
        %v378 = vld [vmem:[%s2] sm:$0xff]
        %v379 = vld [vmem:[%s2 + $0x8] sm:$0xff]
        %v380 = vld [vmem:[%s2 + $0x10] sm:$0xff]
        %v381 = vld [vmem:[%s2 + $0x18] sm:$0xff]
        %v382 = vld [vmem:[%s2 + $0x20] sm:$0xff]
        %v383 = vld [vmem:[%s2 + $0x28] sm:$0xff]
        %v384 = vld [vmem:[%s2 + $0x30] sm:$0xff]
        %v385 = vld [vmem:[%s2 + $0x38] sm:$0xff]
        %vm386 = vcmask 31744
        %v388 = vsel %vm386, %v377, 0
        %v391 = vsel %vm386, %v378, 0
        %v394 = vsel %vm386, %v379, 0
        %v397 = vsel %vm386, %v380, 0
        %v400 = vsel %vm386, %v381, 0
        %v403 = vsel %vm386, %v382, 0
        %v406 = vsel %vm386, %v383, 0
        %v409 = vsel %vm386, %v384, 0
        %v412 = vsel %vm386, %v385, 0
        %414 = vmatprep.subr.mxu0 0.0
        %415 = vmatpush1.xpose.msra.mxu0 %v391
        %416 = vmatprep.subr.mxu0 0.0
        %417 = vmatpush1.xpose.msra.mxu0 %v394
        %418 = vmatprep.subr.mxu0 0.0
        %419 = vmatpush1.xpose.msra.mxu0 %v397
        %420 = vmatprep.subr.mxu0 0.0
        %421 = vmatpush1.xpose.msra.mxu0 %v400
        %422 = vmatprep.subr.mxu0 0.0
        %423 = vmatpush1.xpose.msra.mxu0 %v403
        %424 = vmatprep.subr.mxu0 0.0
        %425 = vmatpush1.xpose.msra.mxu0 %v406
        %426 = vmatprep.subr.mxu0 0.0
        %427 = vmatpush1.xpose.msra.mxu0 %v409
        %428 = vmatprep.subr.mxu0 0.0
        %429 = vmatpush1.xpose.msra.mxu0 %v412
        %430 = vmatprep.subr.mxu0 0.0
        %431 = vmatpush1.xpose.msra.mxu0 0.0
        %432 = vmatprep.subr.mxu0 0.0
        %433 = vmatpush1.xpose.msra.mxu0 0.0
        %434 = vmatprep.subr.mxu0 0.0
        %435 = vmatpush1.xpose.msra.mxu0 0.0
        %436 = vmatprep.subr.mxu0 0.0
        %437 = vmatpush1.xpose.msra.mxu0 0.0
        %438 = vmatprep.subr.mxu0 0.0
        %439 = vmatpush1.xpose.msra.mxu0 0.0
        %440 = vmatprep.subr.mxu0 0.0
        %441 = vmatpush1.xpose.msra.mxu0 0.0
        %442 = vmatprep.subr.mxu0 0.0
        %443 = vmatpush1.xpose.msra.mxu0 0.0
        %444 = vmatprep.subr.mxu0 0.0
        %445 = vmatpush1.xpose.msra.mxu0 0.0
        %446 = vmatprep.subr.mxu0 0.0
        %447 = vmatpush1.xpose.msra.mxu0 0.0
        %448 = vmatprep.subr.mxu0 0.0
        %449 = vmatpush1.xpose.msra.mxu0 0.0
        %450 = vmatprep.subr.mxu0 0.0
        %451 = vmatpush1.xpose.msra.mxu0 0.0
        %452 = vmatprep.subr.mxu0 0.0
        %453 = vmatpush1.xpose.msra.mxu0 0.0
        %454 = vmatprep.subr.mxu0 0.0
        %455 = vmatpush1.xpose.msra.mxu0 0.0
        %456 = vmatprep.subr.mxu0 0.0
        %457 = vmatpush1.xpose.msra.mxu0 0.0
        %458 = vmatprep.subr.mxu0 0.0
        %459 = vmatpush1.xpose.msra.mxu0 0.0
        %460 = vmatprep.subr.mxu0 0.0
        %461 = vmatpush1.xpose.msra.mxu0 0.0
        %462 = vmatprep.subr.mxu0 0.0
        %463 = vmatpush1.xpose.msra.mxu0 0.0
        %464 = vmatprep.subr.mxu0 0.0
        %465 = vmatpush1.xpose.msra.mxu0 0.0
        %466 = vmatprep.subr.mxu0 0.0
        %467 = vmatpush1.xpose.msra.mxu0 0.0
        %468 = vmatprep.subr.mxu0 0.0
        %469 = vmatpush1.xpose.msra.mxu0 0.0
        %470 = vmatprep.subr.mxu0 0.0
        %471 = vmatpush1.xpose.msra.mxu0 0.0
        %472 = vmatprep.subr.mxu0 0.0
        %473 = vmatpush1.xpose.msra.mxu0 0.0
        %474 = vmatprep.subr.mxu0 0.0
        %475 = vmatpush1.xpose.msra.mxu0 0.0
        %476 = vmatprep.subr.mxu0 0.0
        %477 = vmatpush1.xpose.msra.mxu0 0.0
        %478 = vmatprep.mubr.f32.mxu0 0.0
        %479 = vmatmul.mubr.f32.gmra.mrb[0].mxu0 %v388
        %v480 = vpop.f32.mrb[0].mxu0
        %v481 = vadd.f32 0.0, %v480
        %v482 = vpop.f32.mrb[0].mxu0
        %483 = vdwg.mxu0
        %v484 = vxor.u32 %v481, 2147483648
        %v485 = vmul.f32 %v484, 1.442695
        %v486 = vpow.pop %v485
        %v487 = vadd.f32 %v486, 1.0
        %v488 = vrcp.pop %v487
        %v489 = vmul.f32 1.0, %v488
        %v490 = vld [vmem:[%s166] sm:$0xff]
        %v491 = vld [vmem:[%s166 + $0x8] sm:$0xff]
        %v492 = vld [vmem:[%s166 + $0x10] sm:$0xff]
        %v493 = vld [vmem:[%s166 + $0x18] sm:$0xff]
        %v494 = vld [vmem:[%s166 + $0x20] sm:$0xff]
        %v495 = vld [vmem:[%s166 + $0x28] sm:$0xff]
        %v496 = vld [vmem:[%s166 + $0x30] sm:$0xff]
        %v497 = vld [vmem:[%s166 + $0x38] sm:$0xff]
        %v498 = vld [vmem:[%s166 + $0x40] sm:$0xff]
        %v499 = vld [vmem:[%s166 + $0x48] sm:$0xff]
        %v500 = vld [vmem:[%s166 + $0x50] sm:$0xff]
        %v501 = vld [vmem:[%s166 + $0x58] sm:$0xff]
        %v502 = vld [vmem:[%s166 + $0x60] sm:$0xff]
        %v503 = vld [vmem:[%s166 + $0x68] sm:$0xff]
        %v504 = vld [vmem:[%s166 + $0x70] sm:$0xff]
        %v505 = vld [vmem:[%s166 + $0x78] sm:$0xff]
        %v506 = vlaneseq
        %v507 = vshrl.u32 %v506, 7
        %v508 = vsub.s32 0, %v507
        %v509 = vrot.slane %v489, %v508
        %511 = vbcast.lane.b32.xlu0 %v509, 256
        %v512 = vpop.permute.xlu0 %511
        %s514 = sor.u32 256, 8
        %515 = vbcast.lane.b32.xlu0 %v509, %s514
        %v516 = vpop.permute.xlu0 %515
        %s518 = sor.u32 256, 16
        %519 = vbcast.lane.b32.xlu0 %v509, %s518
        %v520 = vpop.permute.xlu0 %519
        %s522 = sor.u32 256, 24
        %523 = vbcast.lane.b32.xlu0 %v509, %s522
        %v524 = vpop.permute.xlu0 %523
        %s526 = sor.u32 256, 32
        %527 = vbcast.lane.b32.xlu0 %v509, %s526
        %v528 = vpop.permute.xlu0 %527
        %s530 = sor.u32 256, 40
        %531 = vbcast.lane.b32.xlu0 %v509, %s530
        %v532 = vpop.permute.xlu0 %531
        %s534 = sor.u32 256, 48
        %535 = vbcast.lane.b32.xlu0 %v509, %s534
        %v536 = vpop.permute.xlu0 %535
        %s538 = sor.u32 256, 56
        %539 = vbcast.lane.b32.xlu0 %v509, %s538
        %v540 = vpop.permute.xlu0 %539
        %v541 = vmul.f32 %v490, %v512
        %v542 = vmul.f32 %v491, %v512
        %v543 = vmul.f32 %v492, %v516
        %v544 = vmul.f32 %v493, %v516
        %v545 = vmul.f32 %v494, %v520
        %v546 = vmul.f32 %v495, %v520
        %v547 = vmul.f32 %v496, %v524
        %v548 = vmul.f32 %v497, %v524
        %v549 = vmul.f32 %v498, %v528
        %v550 = vmul.f32 %v499, %v528
        %v551 = vmul.f32 %v500, %v532
        %v552 = vmul.f32 %v501, %v532
        %v553 = vmul.f32 %v502, %v536
        %v554 = vmul.f32 %v503, %v536
        %v555 = vmul.f32 %v504, %v540
        %v556 = vmul.f32 %v505, %v540
        %557 = vst [vmem:[%s188] sm:$0xff] %v541
        %558 = vst [vmem:[%s188 + $0x8] sm:$0xff] %v542
        %559 = vst [vmem:[%s188 + $0x10] sm:$0xff] %v543
        %560 = vst [vmem:[%s188 + $0x18] sm:$0xff] %v544
        %561 = vst [vmem:[%s188 + $0x20] sm:$0xff] %v545
        %562 = vst [vmem:[%s188 + $0x28] sm:$0xff] %v546
        %563 = vst [vmem:[%s188 + $0x30] sm:$0xff] %v547
        %564 = vst [vmem:[%s188 + $0x38] sm:$0xff] %v548
        %565 = vst [vmem:[%s188 + $0x40] sm:$0xff] %v549
        %566 = vst [vmem:[%s188 + $0x48] sm:$0xff] %v550
        %567 = vst [vmem:[%s188 + $0x50] sm:$0xff] %v551
        %568 = vst [vmem:[%s188 + $0x58] sm:$0xff] %v552
        %569 = vst [vmem:[%s188 + $0x60] sm:$0xff] %v553
        %570 = vst [vmem:[%s188 + $0x68] sm:$0xff] %v554
        %571 = vst [vmem:[%s188 + $0x70] sm:$0xff] %v555
        %572 = vst [vmem:[%s188 + $0x78] sm:$0xff] %v556
        %s573 = sand.u32 %s96, 1
        %s574 = scalar_lea.sflag [#allocation4], %s573
        %s575 = sand.u32 %s96, 1
        %s576 = smul.addr %s575, 128
        %s577 = scalar_lea.vmem [#allocation5], %s576
        // Predicated region
        $region37: #{tpu_custom_call.1} parent=31 // pred_check
          %p578 = pneg %p106
        $region38: #{tpu_custom_call.1} parent=31 // pred_check_branch
          %580 = sbr.rel (%p578) target = $region40
        $region39: #{tpu_custom_call.1} parent=31 // pred_region
          %s582 = ssub.s32 2048, 2048
          %583 = vsyncadd %s574, %s582
          %s584 = smul.addr %s20, 16
          %s585 = smul.addr %s584, 128
          %s586 = scalar_lea.hbm %s3, %s585
          %s587 = sshll.u32 %s577, 4
          %s588 = int_to_ptr.vmem [resolvable:$true] %s587
          %593 = dma.vmem_to_hbm [thread:$0]  %s588, 2048, %s586, %s574, 256, 256, 16
        $region40: #{tpu_custom_call.1} parent=31 // pred_fallthru
          _
      $region32: #{tpu_custom_call.1} parent=5 // pred_fallthru
        _
      %p594 = scmp.le.s32.totalorder 2, %s15
      // Predicated region
      $region41: #{tpu_custom_call.1} parent=5 // pred_check
        %p595 = pneg %p594
      $region42: #{tpu_custom_call.1} parent=5 // pred_check_branch
        %597 = sbr.rel (%p595) target = $region44
      $region43: #{tpu_custom_call.1} parent=5 // pred_region
        %s598 = ssub.s32 %s15, 2
        // Predicated region
        $region45: #{tpu_custom_call.1} parent=43 // pred_check
          %p599 = pneg %p112
        $region46: #{tpu_custom_call.1} parent=43 // pred_check_branch
          %601 = sbr.rel (%p599) target = $region48
        $region47: #{tpu_custom_call.1} parent=43 // pred_region
          %s602 = sand.u32 %s97, 1
          %s603 = scalar_lea.sflag [#allocation4], %s602
          %s604 = sand.u32 %s97, 1
          %s605 = smul.addr %s604, 128
          %s606 = scalar_lea.vmem [#allocation5], %s605
          %607 = dma.done %s603, 2048
        $region48: #{tpu_custom_call.1} parent=43 // pred_fallthru
          _
      $region44: #{tpu_custom_call.1} parent=5 // pred_fallthru
        _
    $region6: #{tpu_custom_call.1} parent=1 // loop_footer
      %s19 = sadd.s32 1, %s15
    $region7: #{tpu_custom_call.1} parent=1 // loop_footer_branch
      %14 = sbr.rel target = $region3
    $region8: #{tpu_custom_call.1} parent=1 // loop_exit
      _
    %608 = vsyncpa [#allocation3], 1
    %s609 = scalar_lea.sflag [#allocation3], 1
    %610 = vsyncpa %s609, 1
    %611 = vsyncpa [#allocation4], 1
    %s612 = scalar_lea.sflag [#allocation4], 1
    %613 = vsyncpa %s612, 1

</llo_original>
